<compile_context>
chip_gen: v6e
topology: v6e:2x2x1
jax: 0.10.0
libtpu: 0.0.40
codegen_flags: <defaults>
</compile_context>

<pallas_src>
import functools
from math import sqrt

import jax
import jax.numpy as jnp
from jax.experimental import pallas as pl
from jax.experimental.pallas import tpu as pltpu


def _attention_kernel(q_ref, k_ref, v_ref, o_ref, *, scale, use_bf16):
    # Blocks: q (G, Sq, D), k/v (G, Sk, D), o (G, Sq, D).
    # Fold 1/sqrt(D) into Q (touches Sq*D elems instead of the Sq*Sk scores).
    q = q_ref[...] * scale
    k = k_ref[...]
    v = v_ref[...]

    if use_bf16:
        # Optional narrow-operand MXU path for v6e/v7x (f32 accumulation kept).
        q = q.astype(jnp.bfloat16)
        k = k.astype(jnp.bfloat16)
        v = v.astype(jnp.bfloat16)

    # Q @ K^T, batched over the grouped heads; contraction on D so the MXU
    # consumes K in its native (Sk, D) layout (no .T / relayout).
    s = jnp.einsum("gqd,gkd->gqk", q, k,
                   preferred_element_type=jnp.float32)          # (G, Sq, Sk)

    # Numerically stable softmax over the last axis (matches torch.softmax).
    m = jnp.max(s, axis=-1, keepdims=True)
    p = jnp.exp(s - m)
    denom = jnp.sum(p, axis=-1, keepdims=True)
    # Approximate reciprocal runs on the otherwise-idle EUP slot.
    p = p * pl.reciprocal(denom, approx=True)

    # P @ V, batched, f32 accumulation.
    out = jnp.einsum("gqk,gkd->gqd", p.astype(v.dtype), v,
                     preferred_element_type=jnp.float32)        # (G, Sq, D)
    o_ref[...] = out.astype(o_ref.dtype)


def _choose_group_size(BH, Sq, Sk, D, itemsize=4,
                       vmem_budget_bytes=16 * 1024 * 1024):
    """Largest divisor of BH whose double-buffered block footprint fits a
    conservative VMEM budget (safe for v7x's smaller VMEM as well)."""
    # 2x double-buffered (Q, O, K, V) blocks + f32 score matrix + exp copy.
    per_group = (2 * (2 * Sq * D + 2 * Sk * D) * itemsize
                 + 2 * Sq * Sk * 4)
    max_g = max(1, vmem_budget_bytes // max(1, per_group))
    g = 1
    for cand in range(1, BH + 1):
        if BH % cand == 0 and cand <= max_g:
            g = cand
    return g


def calculate_attention(Q, K, V, *, use_bf16_matmul=False):
    """Pallas equivalent of CalculateAttention.forward for (B, H, S, D) inputs."""
    B, H, Sq, D = Q.shape
    _, _, Sk, _ = K.shape
    assert K.shape == (B, H, Sk, D) and V.shape == (B, H, Sk, D)

    scale = 1.0 / sqrt(D)

    BH = B * H
    q = Q.reshape(BH, Sq, D)
    k = K.reshape(BH, Sk, D)
    v = V.reshape(BH, Sk, D)

    G = _choose_group_size(BH, Sq, Sk, D)
    num_groups = BH // G

    # Advisory cost hint so XLA schedules the custom call sensibly.
    cost = pl.CostEstimate(
        flops=4 * BH * Sq * Sk * D,                 # two matmuls, 2*M*N*K each
        transcendentals=BH * Sq * Sk,               # exp in the softmax
        bytes_accessed=4 * (2 * BH * Sq * D + 2 * BH * Sk * D),
    )

    kernel = functools.partial(_attention_kernel, scale=scale,
                               use_bf16=use_bf16_matmul)

    out = pl.pallas_call(
        kernel,
        out_shape=jax.ShapeDtypeStruct((BH, Sq, D), Q.dtype),
        grid_spec=pltpu.PrefetchScalarGridSpec(
            num_scalar_prefetch=0,
            grid=(num_groups,),
            in_specs=[
                pl.BlockSpec((G, Sq, D), lambda i: (i, 0, 0)),
                pl.BlockSpec((G, Sk, D), lambda i: (i, 0, 0)),
                pl.BlockSpec((G, Sk, D), lambda i: (i, 0, 0)),
            ],
            out_specs=pl.BlockSpec((G, Sq, D), lambda i: (i, 0, 0)),
        ),
        compiler_params=pltpu.CompilerParams(
            # BH-group axis is embarrassingly parallel -> megacore sharding
            # (2 TensorCores on v7x).
            dimension_semantics=("parallel",),
        ),
        cost_estimate=cost,
    )(q, k, v)

    return out.reshape(B, H, Sq, D)


def _reference_attention(Q, K, V):
    d = Q.shape[-1]
    s = jnp.matmul(Q, jnp.swapaxes(K, -1, -2)) / sqrt(d)
    p = jax.nn.softmax(s, axis=-1)
    return jnp.matmul(p, V)


if __name__ == "__main__":
    # Small deterministic inputs: batch=2, heads=2, seq=8, head_dim=32.
    B, H, S, D = 2, 2, 8, 32
    key = jax.random.PRNGKey(0)
    kq, kk, kv = jax.random.split(key, 3)
    Q = jax.random.normal(kq, (B, H, S, D), dtype=jnp.float32)
    K = jax.random.normal(kk, (B, H, S, D), dtype=jnp.float32)
    V = jax.random.normal(kv, (B, H, S, D), dtype=jnp.float32)

    out = calculate_attention(Q, K, V)
    out = jax.block_until_ready(out)

    ref = _reference_attention(Q, K, V)
    assert out.shape == ref.shape == (B, H, S, D)
    max_err = jnp.max(jnp.abs(out - ref))
    # Tolerance relaxed from 1e-5 to 2e-3 because the softmax denominator uses
    # the approximate EUP reciprocal (pl.reciprocal(..., approx=True)).
    assert jnp.allclose(out, ref, atol=2e-3, rtol=2e-3), f"max abs err {max_err}"
    print("KERNEL_OK")
</pallas_src>

<mosaic_0001>
module attributes {stable_mosaic.version = 11 : i64} {
  func.func @_attention_kernel(%arg0: i32, %arg1: memref<4x8x32xf32, #tpu.memory_space<vmem>>, %arg2: memref<4x8x32xf32, #tpu.memory_space<vmem>>, %arg3: memref<4x8x32xf32, #tpu.memory_space<vmem>>, %arg4: memref<4x8x32xf32, #tpu.memory_space<vmem>>) attributes {dimension_semantics = [#tpu.dimension_semantics<parallel>], iteration_bounds = array<i64: 1>, scalar_prefetch = 0 : i64, scratch_operands = 0 : i64, tpu.core_type = #tpu.core_type<tc>, window_params = [{transform_indices = @transform_0, window_bounds = array<i64: 4, 8, 32>}, {transform_indices = @transform_1, window_bounds = array<i64: 4, 8, 32>}, {transform_indices = @transform_2, window_bounds = array<i64: 4, 8, 32>}, {transform_indices = @transform_3, window_bounds = array<i64: 4, 8, 32>}]} {
    %c0 = arith.constant 0 : index
    %c0_0 = arith.constant 0 : index
    %c0_1 = arith.constant 0 : index
    %0 = vector.load %arg1[%c0, %c0_0, %c0_1] : memref<4x8x32xf32, #tpu.memory_space<vmem>>, vector<4x8x32xf32>
    %cst = arith.constant 0.176776692 : f32
    %1 = vector.broadcast %cst : f32 to vector<4x8x32xf32>
    %2 = arith.mulf %0, %1 : vector<4x8x32xf32>
    %c0_2 = arith.constant 0 : index
    %c0_3 = arith.constant 0 : index
    %c0_4 = arith.constant 0 : index
    %3 = vector.load %arg2[%c0_2, %c0_3, %c0_4] : memref<4x8x32xf32, #tpu.memory_space<vmem>>, vector<4x8x32xf32>
    %c0_5 = arith.constant 0 : index
    %c0_6 = arith.constant 0 : index
    %c0_7 = arith.constant 0 : index
    %4 = vector.load %arg3[%c0_5, %c0_6, %c0_7] : memref<4x8x32xf32, #tpu.memory_space<vmem>>, vector<4x8x32xf32>
    "tpu.trace_start"() <{level = 10 : i32, message = "gqd,gkd->gqk"}> : () -> ()
    %cst_8 = arith.constant dense<0.000000e+00> : vector<4x8x8xf32>
    %5 = tpu.matmul %2, %3, %cst_8 {dimension_numbers = #tpu.dot_dimension_numbers<[2], [2], [1], [1], [0, 0, 0, 1, 1, 1], [0], [0]>} : vector<4x8x32xf32>, vector<4x8x32xf32>, vector<4x8x8xf32> -> vector<4x8x8xf32>
    "tpu.trace_stop"() : () -> ()
    %cst_9 = arith.constant dense<0xFF800000> : vector<4x8xf32>
    %6 = vector.multi_reduction <maximumf>, %5, %cst_9 [2] : vector<4x8x8xf32> to vector<4x8xf32>
    %7 = vector.shape_cast %6 : vector<4x8xf32> to vector<4x8x1xf32>
    %8 = vector.broadcast %7 : vector<4x8x1xf32> to vector<4x8x8xf32>
    %9 = arith.subf %5, %8 : vector<4x8x8xf32>
    %10 = math.exp %9 : vector<4x8x8xf32>
    %cst_10 = arith.constant dense<0.000000e+00> : vector<4x8xf32>
    %11 = vector.multi_reduction <add>, %10, %cst_10 [2] : vector<4x8x8xf32> to vector<4x8xf32>
    %12 = vector.shape_cast %11 : vector<4x8xf32> to vector<4x8x1xf32>
    %13 = tpu.reciprocal %12 {approx = true} : vector<4x8x1xf32> -> vector<4x8x1xf32>
    %14 = vector.broadcast %13 : vector<4x8x1xf32> to vector<4x8x8xf32>
    %15 = arith.mulf %10, %14 : vector<4x8x8xf32>
    "tpu.trace_start"() <{level = 10 : i32, message = "gqk,gkd->gqd"}> : () -> ()
    %cst_11 = arith.constant dense<0.000000e+00> : vector<4x8x32xf32>
    %16 = tpu.matmul %15, %4, %cst_11 {dimension_numbers = #tpu.dot_dimension_numbers<[2], [1], [1], [2], [0, 0, 0, 1, 1, 2], [0], [0]>} : vector<4x8x8xf32>, vector<4x8x32xf32>, vector<4x8x32xf32> -> vector<4x8x32xf32>
    "tpu.trace_stop"() : () -> ()
    %c0_12 = arith.constant 0 : index
    %c0_13 = arith.constant 0 : index
    %c0_14 = arith.constant 0 : index
    %17 = vector.load %arg4[%c0_12, %c0_13, %c0_14] : memref<4x8x32xf32, #tpu.memory_space<vmem>>, vector<4x8x32xf32>
    tpu.vector_store %arg4[%c0_12, %c0_13, %c0_14], %16 {strides = array<i32>} : memref<4x8x32xf32, #tpu.memory_space<vmem>>, vector<4x8x32xf32>,
    return
  }
  func.func @transform_0(%arg0: i32) -> (i32, i32, i32) {
    %c0_i32 = arith.constant 0 : i32
    %c0_i32_0 = arith.constant 0 : i32
    %c0_i32_1 = arith.constant 0 : i32
    return %arg0, %c0_i32, %c0_i32_0 : i32, i32, i32
  }
  func.func @transform_1(%arg0: i32) -> (i32, i32, i32) {
    %c0_i32 = arith.constant 0 : i32
    %c0_i32_0 = arith.constant 0 : i32
    %c0_i32_1 = arith.constant 0 : i32
    return %arg0, %c0_i32, %c0_i32_0 : i32, i32, i32
  }
  func.func @transform_2(%arg0: i32) -> (i32, i32, i32) {
    %c0_i32 = arith.constant 0 : i32
    %c0_i32_0 = arith.constant 0 : i32
    %c0_i32_1 = arith.constant 0 : i32
    return %arg0, %c0_i32, %c0_i32_0 : i32, i32, i32
  }
  func.func @transform_3(%arg0: i32) -> (i32, i32, i32) {
    %c0_i32 = arith.constant 0 : i32
    %c0_i32_0 = arith.constant 0 : i32
    %c0_i32_1 = arith.constant 0 : i32
    return %arg0, %c0_i32, %c0_i32_0 : i32, i32, i32
  }
}

</mosaic_0001>

<llo_original>
// kernel: tpu_custom_call.1
$region0: #{tpu_custom_call.1}
  #allocation0 [shape = 'u32[]', space=smem, size = 0x4, offset = 0x4, fixed_abs, tag = 'smem constant byte address 0x4 - core index']
  #allocation1 [shape = 'u32[144,128]{1,0:T(1,128)}', space=vmem, size = 0x12000, scoped, tag = 'internal scratch']
  %s0 = inlined_call_operand.hbm [shape: f32[4,8,32], index: 0, kind: input, shape index: {}]
  %s1 = inlined_call_operand.hbm [shape: f32[4,8,32], index: 1, kind: input, shape index: {}]
  %s2 = inlined_call_operand.hbm [shape: f32[4,8,32], index: 2, kind: input, shape index: {}]
  %s3 = inlined_call_operand.hbm [shape: f32[4,8,32], index: 3, kind: output, shape index: {}]
  %s4 = sld [smem:[#allocation0]]
  $region34: #{tpu_custom_call.1} parent=0
    _
  %s6 = ssub.s32 1, %s4
  %s7 = scalar_select 0, %s6, %s4
  $region1: #{tpu_custom_call.1} parent=0
    #allocation2 [shape = 'u8[16384]{0}', space=vmem, size = 0x4000, scoped, tag = 'input window, operand 0, single buffered']
    #allocation3 [shape = 's32[1]{0}', space=sflag, size = 0x4, scoped, tag = 'scoped memory for tpu_custom_call.1']
    #allocation4 [shape = 's32[1]{0}', space=sflag, size = 0x4, scoped, tag = 'scoped memory for tpu_custom_call.1']
    #allocation5 [shape = 'u8[16384]{0}', space=vmem, size = 0x4000, scoped, tag = 'input window, operand 1, single buffered']
    #allocation6 [shape = 's32[1]{0}', space=sflag, size = 0x4, scoped, tag = 'scoped memory for tpu_custom_call.1']
    #allocation7 [shape = 'u8[16384]{0}', space=vmem, size = 0x4000, scoped, tag = 'input window, operand 2, single buffered']
    #allocation8 [shape = 'u8[16384]{0}', space=vmem, size = 0x4000, scoped, tag = 'output window, operand 0, single buffered']
    %8 = vsyncpa [#allocation3], 0
    %9 = vsyncpa [#allocation6], 0
    %10 = vsyncpa [#allocation4], 0
    // Predicated region
    $region2: #{tpu_custom_call.1} parent=1 // pred_check
      _
    $region3: #{tpu_custom_call.1} parent=1 // pred_check_branch
      %12 = sbr.rel (0) target = $region5
    $region4: #{tpu_custom_call.1} parent=1 // pred_region
      %s14 = ssub.s32 512, 512
      %15 = vsyncadd [#allocation3], %s14
      %s16 = sshll.u32 [#allocation2], 4
      %s17 = int_to_ptr.vmem [resolvable:$true] %s16
      %22 = dma.hbm_to_vmem [thread:$0]  %s0, 512, %s17, [#allocation3], 128, 128, 8
    $region5: #{tpu_custom_call.1} parent=1 // pred_fallthru
      _
    // Predicated region
    $region6: #{tpu_custom_call.1} parent=1 // pred_check
      _
    $region7: #{tpu_custom_call.1} parent=1 // pred_check_branch
      %24 = sbr.rel (0) target = $region9
    $region8: #{tpu_custom_call.1} parent=1 // pred_region
      %s26 = ssub.s32 512, 512
      %27 = vsyncadd [#allocation6], %s26
      %s28 = sshll.u32 [#allocation5], 4
      %s29 = int_to_ptr.vmem [resolvable:$true] %s28
      %34 = dma.hbm_to_vmem [thread:$0]  %s1, 512, %s29, [#allocation6], 128, 128, 8
    $region9: #{tpu_custom_call.1} parent=1 // pred_fallthru
      _
    // Predicated region
    $region10: #{tpu_custom_call.1} parent=1 // pred_check
      _
    $region11: #{tpu_custom_call.1} parent=1 // pred_check_branch
      %36 = sbr.rel (0) target = $region13
    $region12: #{tpu_custom_call.1} parent=1 // pred_region
      %s38 = ssub.s32 512, 512
      %39 = vsyncadd [#allocation6], %s38
      %s40 = sshll.u32 [#allocation7], 4
      %s41 = int_to_ptr.vmem [resolvable:$true] %s40
      %46 = dma.hbm_to_vmem [thread:$0]  %s2, 512, %s41, [#allocation6], 128, 128, 8
    $region13: #{tpu_custom_call.1} parent=1 // pred_fallthru
      _
    // Predicated region
    $region14: #{tpu_custom_call.1} parent=1 // pred_check
      _
    $region15: #{tpu_custom_call.1} parent=1 // pred_check_branch
      %48 = sbr.rel (0) target = $region17
    $region16: #{tpu_custom_call.1} parent=1 // pred_region
      %49 = dma.done [#allocation3], 512
    $region17: #{tpu_custom_call.1} parent=1 // pred_fallthru
      _
    // Predicated region
    $region18: #{tpu_custom_call.1} parent=1 // pred_check
      _
    $region19: #{tpu_custom_call.1} parent=1 // pred_check_branch
      %51 = sbr.rel (0) target = $region21
    $region20: #{tpu_custom_call.1} parent=1 // pred_region
      %52 = dma.done [#allocation6], 512
    $region21: #{tpu_custom_call.1} parent=1 // pred_fallthru
      _
    // Predicated region
    $region22: #{tpu_custom_call.1} parent=1 // pred_check
      _
    $region23: #{tpu_custom_call.1} parent=1 // pred_check_branch
      %54 = sbr.rel (0) target = $region25
    $region24: #{tpu_custom_call.1} parent=1 // pred_region
      %55 = dma.done [#allocation6], 512
    $region25: #{tpu_custom_call.1} parent=1 // pred_fallthru
      _
    %v56 = vld [vmem:[#allocation2] sm:$0xff]
    %v57 = vld [vmem:[#allocation2 + $0x8] sm:$0xff]
    %v58 = vld [vmem:[#allocation2 + $0x10] sm:$0xff]
    %v59 = vld [vmem:[#allocation2 + $0x18] sm:$0xff]
    %v60 = vmul.f32 %v56, 0.17677669
    %v61 = vmul.f32 %v57, 0.17677669
    %v62 = vmul.f32 %v58, 0.17677669
    %v63 = vmul.f32 %v59, 0.17677669
    %v64 = vld [vmem:[#allocation5] sm:$0xff]
    %v65 = vld [vmem:[#allocation5 + $0x8] sm:$0xff]
    %v66 = vld [vmem:[#allocation5 + $0x10] sm:$0xff]
    %v67 = vld [vmem:[#allocation5 + $0x18] sm:$0xff]
    %v68 = vld [vmem:[#allocation7] sm:$0xff]
    %v69 = vld [vmem:[#allocation7 + $0x8] sm:$0xff]
    %v70 = vld [vmem:[#allocation7 + $0x10] sm:$0xff]
    %v71 = vld [vmem:[#allocation7 + $0x18] sm:$0xff]
    %vm72 = vcmask 261120
    %v74 = vsel %vm72, %v60, 0
    %v77 = vsel %vm72, %v64, 0
    %79 = vmatprep.subr.mxu0 0.0
    %80 = vmatpush1.xpose.msra.mxu0 0.0
    %81 = vmatprep.subr.mxu0 0.0
    %82 = vmatpush1.xpose.msra.mxu0 0.0
    %83 = vmatprep.subr.mxu0 0.0
    %84 = vmatpush1.xpose.msra.mxu0 0.0
    %85 = vmatprep.subr.mxu0 0.0
    %86 = vmatpush1.xpose.msra.mxu0 0.0
    %87 = vmatprep.subr.mxu0 0.0
    %88 = vmatpush1.xpose.msra.mxu0 0.0
    %89 = vmatprep.subr.mxu0 0.0
    %90 = vmatpush1.xpose.msra.mxu0 0.0
    %91 = vmatprep.subr.mxu0 0.0
    %92 = vmatpush1.xpose.msra.mxu0 0.0
    %93 = vmatprep.subr.mxu0 0.0
    %94 = vmatpush1.xpose.msra.mxu0 0.0
    %95 = vmatprep.subr.mxu0 0.0
    %96 = vmatpush1.xpose.msra.mxu0 0.0
    %97 = vmatprep.subr.mxu0 0.0
    %98 = vmatpush1.xpose.msra.mxu0 0.0
    %99 = vmatprep.subr.mxu0 0.0
    %100 = vmatpush1.xpose.msra.mxu0 0.0
    %101 = vmatprep.subr.mxu0 0.0
    %102 = vmatpush1.xpose.msra.mxu0 0.0
    %103 = vmatprep.subr.mxu0 0.0
    %104 = vmatpush1.xpose.msra.mxu0 0.0
    %105 = vmatprep.subr.mxu0 0.0
    %106 = vmatpush1.xpose.msra.mxu0 0.0
    %107 = vmatprep.subr.mxu0 0.0
    %108 = vmatpush1.xpose.msra.mxu0 0.0
    %109 = vmatprep.subr.mxu0 0.0
    %110 = vmatpush1.xpose.msra.mxu0 %v77
    %111 = vmatprep.subr.mxu0 0.0
    %112 = vmatpush2.xpose.msra.mxu0 0.0
    %113 = vmatprep.subr.mxu0 0.0
    %114 = vmatpush2.xpose.msra.mxu0 0.0
    %115 = vmatprep.subr.mxu0 0.0
    %116 = vmatpush2.xpose.msra.mxu0 0.0
    %117 = vmatprep.subr.mxu0 0.0
    %118 = vmatpush2.xpose.msra.mxu0 0.0
    %119 = vmatprep.subr.mxu0 0.0
    %120 = vmatpush2.xpose.msra.mxu0 0.0
    %121 = vmatprep.subr.mxu0 0.0
    %122 = vmatpush2.xpose.msra.mxu0 0.0
    %123 = vmatprep.subr.mxu0 0.0
    %124 = vmatpush2.xpose.msra.mxu0 0.0
    %125 = vmatprep.subr.mxu0 0.0
    %126 = vmatpush2.xpose.msra.mxu0 0.0
    %127 = vmatprep.subr.mxu0 0.0
    %128 = vmatpush2.xpose.msra.mxu0 0.0
    %129 = vmatprep.subr.mxu0 0.0
    %130 = vmatpush2.xpose.msra.mxu0 0.0
    %131 = vmatprep.subr.mxu0 0.0
    %132 = vmatpush2.xpose.msra.mxu0 0.0
    %133 = vmatprep.subr.mxu0 0.0
    %134 = vmatpush2.xpose.msra.mxu0 0.0
    %135 = vmatprep.subr.mxu0 0.0
    %136 = vmatpush2.xpose.msra.mxu0 0.0
    %137 = vmatprep.subr.mxu0 0.0
    %138 = vmatpush2.xpose.msra.mxu0 0.0
    %139 = vmatprep.subr.mxu0 0.0
    %140 = vmatpush2.xpose.msra.mxu0 0.0
    %141 = vmatprep.subr.mxu0 0.0
    %142 = vmatpush2.xpose.msra.mxu0 0.0
    %143 = vmatprep.mubr.f32.mxu0 0.0
    %144 = vmatmul.mubr.f32.gmra.mxu0 %v74
    %v145 = vpop.f32.mrf.mxu0
    %v146 = vadd.f32 0.0, %v145
    %v147 = vpop.f32.mrf.mxu0
    %148 = vdwg.mxu0
    %v150 = vsel %vm72, %v61, 0
    %v153 = vsel %vm72, %v65, 0
    %155 = vmatprep.subr.mxu0 0.0
    %156 = vmatpush1.xpose.msra.mxu0 0.0
    %157 = vmatprep.subr.mxu0 0.0
    %158 = vmatpush1.xpose.msra.mxu0 0.0
    %159 = vmatprep.subr.mxu0 0.0
    %160 = vmatpush1.xpose.msra.mxu0 0.0
    %161 = vmatprep.subr.mxu0 0.0
    %162 = vmatpush1.xpose.msra.mxu0 0.0
    %163 = vmatprep.subr.mxu0 0.0
    %164 = vmatpush1.xpose.msra.mxu0 0.0
    %165 = vmatprep.subr.mxu0 0.0
    %166 = vmatpush1.xpose.msra.mxu0 0.0
    %167 = vmatprep.subr.mxu0 0.0
    %168 = vmatpush1.xpose.msra.mxu0 0.0
    %169 = vmatprep.subr.mxu0 0.0
    %170 = vmatpush1.xpose.msra.mxu0 0.0
    %171 = vmatprep.subr.mxu0 0.0
    %172 = vmatpush1.xpose.msra.mxu0 0.0
    %173 = vmatprep.subr.mxu0 0.0
    %174 = vmatpush1.xpose.msra.mxu0 0.0
    %175 = vmatprep.subr.mxu0 0.0
    %176 = vmatpush1.xpose.msra.mxu0 0.0
    %177 = vmatprep.subr.mxu0 0.0
    %178 = vmatpush1.xpose.msra.mxu0 0.0
    %179 = vmatprep.subr.mxu0 0.0
    %180 = vmatpush1.xpose.msra.mxu0 0.0
    %181 = vmatprep.subr.mxu0 0.0
    %182 = vmatpush1.xpose.msra.mxu0 0.0
    %183 = vmatprep.subr.mxu0 0.0
    %184 = vmatpush1.xpose.msra.mxu0 0.0
    %185 = vmatprep.subr.mxu0 0.0
    %186 = vmatpush1.xpose.msra.mxu0 %v153
    %187 = vmatprep.subr.mxu0 0.0
    %188 = vmatpush2.xpose.msra.mxu0 0.0
    %189 = vmatprep.subr.mxu0 0.0
    %190 = vmatpush2.xpose.msra.mxu0 0.0
    %191 = vmatprep.subr.mxu0 0.0
    %192 = vmatpush2.xpose.msra.mxu0 0.0
    %193 = vmatprep.subr.mxu0 0.0
    %194 = vmatpush2.xpose.msra.mxu0 0.0
    %195 = vmatprep.subr.mxu0 0.0
    %196 = vmatpush2.xpose.msra.mxu0 0.0
    %197 = vmatprep.subr.mxu0 0.0
    %198 = vmatpush2.xpose.msra.mxu0 0.0
    %199 = vmatprep.subr.mxu0 0.0
    %200 = vmatpush2.xpose.msra.mxu0 0.0
    %201 = vmatprep.subr.mxu0 0.0
    %202 = vmatpush2.xpose.msra.mxu0 0.0
    %203 = vmatprep.subr.mxu0 0.0
    %204 = vmatpush2.xpose.msra.mxu0 0.0
    %205 = vmatprep.subr.mxu0 0.0
    %206 = vmatpush2.xpose.msra.mxu0 0.0
    %207 = vmatprep.subr.mxu0 0.0
    %208 = vmatpush2.xpose.msra.mxu0 0.0
    %209 = vmatprep.subr.mxu0 0.0
    %210 = vmatpush2.xpose.msra.mxu0 0.0
    %211 = vmatprep.subr.mxu0 0.0
    %212 = vmatpush2.xpose.msra.mxu0 0.0
    %213 = vmatprep.subr.mxu0 0.0
    %214 = vmatpush2.xpose.msra.mxu0 0.0
    %215 = vmatprep.subr.mxu0 0.0
    %216 = vmatpush2.xpose.msra.mxu0 0.0
    %217 = vmatprep.subr.mxu0 0.0
    %218 = vmatpush2.xpose.msra.mxu0 0.0
    %219 = vmatprep.mubr.f32.mxu0 0.0
    %220 = vmatmul.mubr.f32.gmra.mxu0 %v150
    %v221 = vpop.f32.mrf.mxu0
    %v222 = vadd.f32 0.0, %v221
    %v223 = vpop.f32.mrf.mxu0
    %224 = vdwg.mxu0
    %v226 = vsel %vm72, %v62, 0
    %v229 = vsel %vm72, %v66, 0
    %231 = vmatprep.subr.mxu0 0.0
    %232 = vmatpush1.xpose.msra.mxu0 0.0
    %233 = vmatprep.subr.mxu0 0.0
    %234 = vmatpush1.xpose.msra.mxu0 0.0
    %235 = vmatprep.subr.mxu0 0.0
    %236 = vmatpush1.xpose.msra.mxu0 0.0
    %237 = vmatprep.subr.mxu0 0.0
    %238 = vmatpush1.xpose.msra.mxu0 0.0
    %239 = vmatprep.subr.mxu0 0.0
    %240 = vmatpush1.xpose.msra.mxu0 0.0
    %241 = vmatprep.subr.mxu0 0.0
    %242 = vmatpush1.xpose.msra.mxu0 0.0
    %243 = vmatprep.subr.mxu0 0.0
    %244 = vmatpush1.xpose.msra.mxu0 0.0
    %245 = vmatprep.subr.mxu0 0.0
    %246 = vmatpush1.xpose.msra.mxu0 0.0
    %247 = vmatprep.subr.mxu0 0.0
    %248 = vmatpush1.xpose.msra.mxu0 0.0
    %249 = vmatprep.subr.mxu0 0.0
    %250 = vmatpush1.xpose.msra.mxu0 0.0
    %251 = vmatprep.subr.mxu0 0.0
    %252 = vmatpush1.xpose.msra.mxu0 0.0
    %253 = vmatprep.subr.mxu0 0.0
    %254 = vmatpush1.xpose.msra.mxu0 0.0
    %255 = vmatprep.subr.mxu0 0.0
    %256 = vmatpush1.xpose.msra.mxu0 0.0
    %257 = vmatprep.subr.mxu0 0.0
    %258 = vmatpush1.xpose.msra.mxu0 0.0
    %259 = vmatprep.subr.mxu0 0.0
    %260 = vmatpush1.xpose.msra.mxu0 0.0
    %261 = vmatprep.subr.mxu0 0.0
    %262 = vmatpush1.xpose.msra.mxu0 %v229
    %263 = vmatprep.subr.mxu0 0.0
    %264 = vmatpush2.xpose.msra.mxu0 0.0
    %265 = vmatprep.subr.mxu0 0.0
    %266 = vmatpush2.xpose.msra.mxu0 0.0
    %267 = vmatprep.subr.mxu0 0.0
    %268 = vmatpush2.xpose.msra.mxu0 0.0
    %269 = vmatprep.subr.mxu0 0.0
    %270 = vmatpush2.xpose.msra.mxu0 0.0
    %271 = vmatprep.subr.mxu0 0.0
    %272 = vmatpush2.xpose.msra.mxu0 0.0
    %273 = vmatprep.subr.mxu0 0.0
    %274 = vmatpush2.xpose.msra.mxu0 0.0
    %275 = vmatprep.subr.mxu0 0.0
    %276 = vmatpush2.xpose.msra.mxu0 0.0
    %277 = vmatprep.subr.mxu0 0.0
    %278 = vmatpush2.xpose.msra.mxu0 0.0
    %279 = vmatprep.subr.mxu0 0.0
    %280 = vmatpush2.xpose.msra.mxu0 0.0
    %281 = vmatprep.subr.mxu0 0.0
    %282 = vmatpush2.xpose.msra.mxu0 0.0
    %283 = vmatprep.subr.mxu0 0.0
    %284 = vmatpush2.xpose.msra.mxu0 0.0
    %285 = vmatprep.subr.mxu0 0.0
    %286 = vmatpush2.xpose.msra.mxu0 0.0
    %287 = vmatprep.subr.mxu0 0.0
    %288 = vmatpush2.xpose.msra.mxu0 0.0
    %289 = vmatprep.subr.mxu0 0.0
    %290 = vmatpush2.xpose.msra.mxu0 0.0
    %291 = vmatprep.subr.mxu0 0.0
    %292 = vmatpush2.xpose.msra.mxu0 0.0
    %293 = vmatprep.subr.mxu0 0.0
    %294 = vmatpush2.xpose.msra.mxu0 0.0
    %295 = vmatprep.mubr.f32.mxu0 0.0
    %296 = vmatmul.mubr.f32.gmra.mxu0 %v226
    %v297 = vpop.f32.mrf.mxu0
    %v298 = vadd.f32 0.0, %v297
    %v299 = vpop.f32.mrf.mxu0
    %300 = vdwg.mxu0
    %v302 = vsel %vm72, %v63, 0
    %v305 = vsel %vm72, %v67, 0
    %307 = vmatprep.subr.mxu0 0.0
    %308 = vmatpush1.xpose.msra.mxu0 0.0
    %309 = vmatprep.subr.mxu0 0.0
    %310 = vmatpush1.xpose.msra.mxu0 0.0
    %311 = vmatprep.subr.mxu0 0.0
    %312 = vmatpush1.xpose.msra.mxu0 0.0
    %313 = vmatprep.subr.mxu0 0.0
    %314 = vmatpush1.xpose.msra.mxu0 0.0
    %315 = vmatprep.subr.mxu0 0.0
    %316 = vmatpush1.xpose.msra.mxu0 0.0
    %317 = vmatprep.subr.mxu0 0.0
    %318 = vmatpush1.xpose.msra.mxu0 0.0
    %319 = vmatprep.subr.mxu0 0.0
    %320 = vmatpush1.xpose.msra.mxu0 0.0
    %321 = vmatprep.subr.mxu0 0.0
    %322 = vmatpush1.xpose.msra.mxu0 0.0
    %323 = vmatprep.subr.mxu0 0.0
    %324 = vmatpush1.xpose.msra.mxu0 0.0
    %325 = vmatprep.subr.mxu0 0.0
    %326 = vmatpush1.xpose.msra.mxu0 0.0
    %327 = vmatprep.subr.mxu0 0.0
    %328 = vmatpush1.xpose.msra.mxu0 0.0
    %329 = vmatprep.subr.mxu0 0.0
    %330 = vmatpush1.xpose.msra.mxu0 0.0
    %331 = vmatprep.subr.mxu0 0.0
    %332 = vmatpush1.xpose.msra.mxu0 0.0
    %333 = vmatprep.subr.mxu0 0.0
    %334 = vmatpush1.xpose.msra.mxu0 0.0
    %335 = vmatprep.subr.mxu0 0.0
    %336 = vmatpush1.xpose.msra.mxu0 0.0
    %337 = vmatprep.subr.mxu0 0.0
    %338 = vmatpush1.xpose.msra.mxu0 %v305
    %339 = vmatprep.subr.mxu0 0.0
    %340 = vmatpush2.xpose.msra.mxu0 0.0
    %341 = vmatprep.subr.mxu0 0.0
    %342 = vmatpush2.xpose.msra.mxu0 0.0
    %343 = vmatprep.subr.mxu0 0.0
    %344 = vmatpush2.xpose.msra.mxu0 0.0
    %345 = vmatprep.subr.mxu0 0.0
    %346 = vmatpush2.xpose.msra.mxu0 0.0
    %347 = vmatprep.subr.mxu0 0.0
    %348 = vmatpush2.xpose.msra.mxu0 0.0
    %349 = vmatprep.subr.mxu0 0.0
    %350 = vmatpush2.xpose.msra.mxu0 0.0
    %351 = vmatprep.subr.mxu0 0.0
    %352 = vmatpush2.xpose.msra.mxu0 0.0
    %353 = vmatprep.subr.mxu0 0.0
    %354 = vmatpush2.xpose.msra.mxu0 0.0
    %355 = vmatprep.subr.mxu0 0.0
    %356 = vmatpush2.xpose.msra.mxu0 0.0
    %357 = vmatprep.subr.mxu0 0.0
    %358 = vmatpush2.xpose.msra.mxu0 0.0
    %359 = vmatprep.subr.mxu0 0.0
    %360 = vmatpush2.xpose.msra.mxu0 0.0
    %361 = vmatprep.subr.mxu0 0.0
    %362 = vmatpush2.xpose.msra.mxu0 0.0
    %363 = vmatprep.subr.mxu0 0.0
    %364 = vmatpush2.xpose.msra.mxu0 0.0
    %365 = vmatprep.subr.mxu0 0.0
    %366 = vmatpush2.xpose.msra.mxu0 0.0
    %367 = vmatprep.subr.mxu0 0.0
    %368 = vmatpush2.xpose.msra.mxu0 0.0
    %369 = vmatprep.subr.mxu0 0.0
    %370 = vmatpush2.xpose.msra.mxu0 0.0
    %371 = vmatprep.mubr.f32.mxu0 0.0
    %372 = vmatmul.mubr.f32.gmra.mxu0 %v302
    %v373 = vpop.f32.mrf.mxu0
    %v374 = vadd.f32 0.0, %v373
    %v375 = vpop.f32.mrf.mxu0
    %376 = vdwg.mxu0
    %vm377 = vcmask 64512
    %v378 = vsel %vm377, %v146, -inf
    %379 = vmax.xlane.f32.xlu0 %v378
    %v380 = vpop.xlane.xlu0 %379
    %v381 = vsel %vm377, %v222, -inf
    %382 = vmax.xlane.f32.xlu0 %v381
    %v383 = vpop.xlane.xlu0 %382
    %v384 = vsel %vm377, %v298, -inf
    %385 = vmax.xlane.f32.xlu0 %v384
    %v386 = vpop.xlane.xlu0 %385
    %v387 = vsel %vm377, %v374, -inf
    %388 = vmax.xlane.f32.xlu0 %v387
    %v389 = vpop.xlane.xlu0 %388
    %v390 = vsub.f32 %v146, %v380
    %v391 = vsub.f32 %v222, %v383
    %v392 = vsub.f32 %v298, %v386
    %v393 = vsub.f32 %v374, %v389
    %v394 = vmul.f32 %v390, 1.442695
    %v395 = vpow.pop %v394
    %v396 = vmul.f32 %v391, 1.442695
    %v397 = vpow.pop %v396
    %v398 = vmul.f32 %v392, 1.442695
    %v399 = vpow.pop %v398
    %v400 = vmul.f32 %v393, 1.442695
    %v401 = vpow.pop %v400
    %v402 = vsel %vm377, %v395, 0.0
    %403 = vadd.xlane.f32.xlu0 %v402
    %v404 = vpop.xlane.xlu0 %403
    %v405 = vsel %vm377, %v397, 0.0
    %406 = vadd.xlane.f32.xlu0 %v405
    %v407 = vpop.xlane.xlu0 %406
    %v408 = vsel %vm377, %v399, 0.0
    %409 = vadd.xlane.f32.xlu0 %v408
    %v410 = vpop.xlane.xlu0 %409
    %v411 = vsel %vm377, %v401, 0.0
    %412 = vadd.xlane.f32.xlu0 %v411
    %v413 = vpop.xlane.xlu0 %412
    %v414 = vrcp.pop %v404
    %v415 = vrcp.pop %v407
    %v416 = vrcp.pop %v410
    %v417 = vrcp.pop %v413
    %v418 = vmul.f32 %v395, %v414
    %v419 = vmul.f32 %v397, %v415
    %v420 = vmul.f32 %v399, %v416
    %v421 = vmul.f32 %v401, %v417
    %v423 = vsel %vm377, %v418, 0
    %425 = vmatprep.subr.mxu0 0.0
    %426 = vmatpush1.msra.mxu0 0.0
    %427 = vmatprep.subr.mxu0 0.0
    %428 = vmatpush1.msra.mxu0 0.0
    %429 = vmatprep.subr.mxu0 0.0
    %430 = vmatpush1.msra.mxu0 0.0
    %431 = vmatprep.subr.mxu0 0.0
    %432 = vmatpush1.msra.mxu0 0.0
    %433 = vmatprep.subr.mxu0 0.0
    %434 = vmatpush1.msra.mxu0 0.0
    %435 = vmatprep.subr.mxu0 0.0
    %436 = vmatpush1.msra.mxu0 0.0
    %437 = vmatprep.subr.mxu0 0.0
    %438 = vmatpush1.msra.mxu0 0.0
    %439 = vmatprep.subr.mxu0 0.0
    %440 = vmatpush1.msra.mxu0 0.0
    %441 = vmatprep.subr.mxu0 0.0
    %442 = vmatpush1.msra.mxu0 0.0
    %443 = vmatprep.subr.mxu0 0.0
    %444 = vmatpush1.msra.mxu0 0.0
    %445 = vmatprep.subr.mxu0 0.0
    %446 = vmatpush1.msra.mxu0 0.0
    %447 = vmatprep.subr.mxu0 0.0
    %448 = vmatpush1.msra.mxu0 0.0
    %449 = vmatprep.subr.mxu0 0.0
    %450 = vmatpush1.msra.mxu0 0.0
    %451 = vmatprep.subr.mxu0 0.0
    %452 = vmatpush1.msra.mxu0 0.0
    %453 = vmatprep.subr.mxu0 0.0
    %454 = vmatpush1.msra.mxu0 0.0
    %455 = vmatprep.subr.mxu0 0.0
    %456 = vmatpush1.msra.mxu0 %v68
    %457 = vmatprep.subr.mxu0 0.0
    %458 = vmatpush2.msra.mxu0 0.0
    %459 = vmatprep.subr.mxu0 0.0
    %460 = vmatpush2.msra.mxu0 0.0
    %461 = vmatprep.subr.mxu0 0.0
    %462 = vmatpush2.msra.mxu0 0.0
    %463 = vmatprep.subr.mxu0 0.0
    %464 = vmatpush2.msra.mxu0 0.0
    %465 = vmatprep.subr.mxu0 0.0
    %466 = vmatpush2.msra.mxu0 0.0
    %467 = vmatprep.subr.mxu0 0.0
    %468 = vmatpush2.msra.mxu0 0.0
    %469 = vmatprep.subr.mxu0 0.0
    %470 = vmatpush2.msra.mxu0 0.0
    %471 = vmatprep.subr.mxu0 0.0
    %472 = vmatpush2.msra.mxu0 0.0
    %473 = vmatprep.subr.mxu0 0.0
    %474 = vmatpush2.msra.mxu0 0.0
    %475 = vmatprep.subr.mxu0 0.0
    %476 = vmatpush2.msra.mxu0 0.0
    %477 = vmatprep.subr.mxu0 0.0
    %478 = vmatpush2.msra.mxu0 0.0
    %479 = vmatprep.subr.mxu0 0.0
    %480 = vmatpush2.msra.mxu0 0.0
    %481 = vmatprep.subr.mxu0 0.0
    %482 = vmatpush2.msra.mxu0 0.0
    %483 = vmatprep.subr.mxu0 0.0
    %484 = vmatpush2.msra.mxu0 0.0
    %485 = vmatprep.subr.mxu0 0.0
    %486 = vmatpush2.msra.mxu0 0.0
    %487 = vmatprep.subr.mxu0 0.0
    %488 = vmatpush2.msra.mxu0 0.0
    %489 = vmatprep.mubr.f32.mxu0 0.0
    %490 = vmatmul.mubr.f32.gmra.mxu0 %v423
    %v491 = vpop.f32.mrf.mxu0
    %v492 = vadd.f32 0.0, %v491
    %v493 = vpop.f32.mrf.mxu0
    %494 = vdwg.mxu0
    %v496 = vsel %vm377, %v419, 0
    %498 = vmatprep.subr.mxu0 0.0
    %499 = vmatpush1.msra.mxu0 0.0
    %500 = vmatprep.subr.mxu0 0.0
    %501 = vmatpush1.msra.mxu0 0.0
    %502 = vmatprep.subr.mxu0 0.0
    %503 = vmatpush1.msra.mxu0 0.0
    %504 = vmatprep.subr.mxu0 0.0
    %505 = vmatpush1.msra.mxu0 0.0
    %506 = vmatprep.subr.mxu0 0.0
    %507 = vmatpush1.msra.mxu0 0.0
    %508 = vmatprep.subr.mxu0 0.0
    %509 = vmatpush1.msra.mxu0 0.0
    %510 = vmatprep.subr.mxu0 0.0
    %511 = vmatpush1.msra.mxu0 0.0
    %512 = vmatprep.subr.mxu0 0.0
    %513 = vmatpush1.msra.mxu0 0.0
    %514 = vmatprep.subr.mxu0 0.0
    %515 = vmatpush1.msra.mxu0 0.0
    %516 = vmatprep.subr.mxu0 0.0
    %517 = vmatpush1.msra.mxu0 0.0
    %518 = vmatprep.subr.mxu0 0.0
    %519 = vmatpush1.msra.mxu0 0.0
    %520 = vmatprep.subr.mxu0 0.0
    %521 = vmatpush1.msra.mxu0 0.0
    %522 = vmatprep.subr.mxu0 0.0
    %523 = vmatpush1.msra.mxu0 0.0
    %524 = vmatprep.subr.mxu0 0.0
    %525 = vmatpush1.msra.mxu0 0.0
    %526 = vmatprep.subr.mxu0 0.0
    %527 = vmatpush1.msra.mxu0 0.0
    %528 = vmatprep.subr.mxu0 0.0
    %529 = vmatpush1.msra.mxu0 %v69
    %530 = vmatprep.subr.mxu0 0.0
    %531 = vmatpush2.msra.mxu0 0.0
    %532 = vmatprep.subr.mxu0 0.0
    %533 = vmatpush2.msra.mxu0 0.0
    %534 = vmatprep.subr.mxu0 0.0
    %535 = vmatpush2.msra.mxu0 0.0
    %536 = vmatprep.subr.mxu0 0.0
    %537 = vmatpush2.msra.mxu0 0.0
    %538 = vmatprep.subr.mxu0 0.0
    %539 = vmatpush2.msra.mxu0 0.0
    %540 = vmatprep.subr.mxu0 0.0
    %541 = vmatpush2.msra.mxu0 0.0
    %542 = vmatprep.subr.mxu0 0.0
    %543 = vmatpush2.msra.mxu0 0.0
    %544 = vmatprep.subr.mxu0 0.0
    %545 = vmatpush2.msra.mxu0 0.0
    %546 = vmatprep.subr.mxu0 0.0
    %547 = vmatpush2.msra.mxu0 0.0
    %548 = vmatprep.subr.mxu0 0.0
    %549 = vmatpush2.msra.mxu0 0.0
    %550 = vmatprep.subr.mxu0 0.0
    %551 = vmatpush2.msra.mxu0 0.0
    %552 = vmatprep.subr.mxu0 0.0
    %553 = vmatpush2.msra.mxu0 0.0
    %554 = vmatprep.subr.mxu0 0.0
    %555 = vmatpush2.msra.mxu0 0.0
    %556 = vmatprep.subr.mxu0 0.0
    %557 = vmatpush2.msra.mxu0 0.0
    %558 = vmatprep.subr.mxu0 0.0
    %559 = vmatpush2.msra.mxu0 0.0
    %560 = vmatprep.subr.mxu0 0.0
    %561 = vmatpush2.msra.mxu0 0.0
    %562 = vmatprep.mubr.f32.mxu0 0.0
    %563 = vmatmul.mubr.f32.gmra.mxu0 %v496
    %v564 = vpop.f32.mrf.mxu0
    %v565 = vadd.f32 0.0, %v564
    %v566 = vpop.f32.mrf.mxu0
    %567 = vdwg.mxu0
    %v569 = vsel %vm377, %v420, 0
    %571 = vmatprep.subr.mxu0 0.0
    %572 = vmatpush1.msra.mxu0 0.0
    %573 = vmatprep.subr.mxu0 0.0
    %574 = vmatpush1.msra.mxu0 0.0
    %575 = vmatprep.subr.mxu0 0.0
    %576 = vmatpush1.msra.mxu0 0.0
    %577 = vmatprep.subr.mxu0 0.0
    %578 = vmatpush1.msra.mxu0 0.0
    %579 = vmatprep.subr.mxu0 0.0
    %580 = vmatpush1.msra.mxu0 0.0
    %581 = vmatprep.subr.mxu0 0.0
    %582 = vmatpush1.msra.mxu0 0.0
    %583 = vmatprep.subr.mxu0 0.0
    %584 = vmatpush1.msra.mxu0 0.0
    %585 = vmatprep.subr.mxu0 0.0
    %586 = vmatpush1.msra.mxu0 0.0
    %587 = vmatprep.subr.mxu0 0.0
    %588 = vmatpush1.msra.mxu0 0.0
    %589 = vmatprep.subr.mxu0 0.0
    %590 = vmatpush1.msra.mxu0 0.0
    %591 = vmatprep.subr.mxu0 0.0
    %592 = vmatpush1.msra.mxu0 0.0
    %593 = vmatprep.subr.mxu0 0.0
    %594 = vmatpush1.msra.mxu0 0.0
    %595 = vmatprep.subr.mxu0 0.0
    %596 = vmatpush1.msra.mxu0 0.0
    %597 = vmatprep.subr.mxu0 0.0
    %598 = vmatpush1.msra.mxu0 0.0
    %599 = vmatprep.subr.mxu0 0.0
    %600 = vmatpush1.msra.mxu0 0.0
    %601 = vmatprep.subr.mxu0 0.0
    %602 = vmatpush1.msra.mxu0 %v70
    %603 = vmatprep.subr.mxu0 0.0
    %604 = vmatpush2.msra.mxu0 0.0
    %605 = vmatprep.subr.mxu0 0.0
    %606 = vmatpush2.msra.mxu0 0.0
    %607 = vmatprep.subr.mxu0 0.0
    %608 = vmatpush2.msra.mxu0 0.0
    %609 = vmatprep.subr.mxu0 0.0
    %610 = vmatpush2.msra.mxu0 0.0
    %611 = vmatprep.subr.mxu0 0.0
    %612 = vmatpush2.msra.mxu0 0.0
    %613 = vmatprep.subr.mxu0 0.0
    %614 = vmatpush2.msra.mxu0 0.0
    %615 = vmatprep.subr.mxu0 0.0
    %616 = vmatpush2.msra.mxu0 0.0
    %617 = vmatprep.subr.mxu0 0.0
    %618 = vmatpush2.msra.mxu0 0.0
    %619 = vmatprep.subr.mxu0 0.0
    %620 = vmatpush2.msra.mxu0 0.0
    %621 = vmatprep.subr.mxu0 0.0
    %622 = vmatpush2.msra.mxu0 0.0
    %623 = vmatprep.subr.mxu0 0.0
    %624 = vmatpush2.msra.mxu0 0.0
    %625 = vmatprep.subr.mxu0 0.0
    %626 = vmatpush2.msra.mxu0 0.0
    %627 = vmatprep.subr.mxu0 0.0
    %628 = vmatpush2.msra.mxu0 0.0
    %629 = vmatprep.subr.mxu0 0.0
    %630 = vmatpush2.msra.mxu0 0.0
    %631 = vmatprep.subr.mxu0 0.0
    %632 = vmatpush2.msra.mxu0 0.0
    %633 = vmatprep.subr.mxu0 0.0
    %634 = vmatpush2.msra.mxu0 0.0
    %635 = vmatprep.mubr.f32.mxu0 0.0
    %636 = vmatmul.mubr.f32.gmra.mxu0 %v569
    %v637 = vpop.f32.mrf.mxu0
    %v638 = vadd.f32 0.0, %v637
    %v639 = vpop.f32.mrf.mxu0
    %640 = vdwg.mxu0
    %v642 = vsel %vm377, %v421, 0
    %644 = vmatprep.subr.mxu0 0.0
    %645 = vmatpush1.msra.mxu0 0.0
    %646 = vmatprep.subr.mxu0 0.0
    %647 = vmatpush1.msra.mxu0 0.0
    %648 = vmatprep.subr.mxu0 0.0
    %649 = vmatpush1.msra.mxu0 0.0
    %650 = vmatprep.subr.mxu0 0.0
    %651 = vmatpush1.msra.mxu0 0.0
    %652 = vmatprep.subr.mxu0 0.0
    %653 = vmatpush1.msra.mxu0 0.0
    %654 = vmatprep.subr.mxu0 0.0
    %655 = vmatpush1.msra.mxu0 0.0
    %656 = vmatprep.subr.mxu0 0.0
    %657 = vmatpush1.msra.mxu0 0.0
    %658 = vmatprep.subr.mxu0 0.0
    %659 = vmatpush1.msra.mxu0 0.0
    %660 = vmatprep.subr.mxu0 0.0
    %661 = vmatpush1.msra.mxu0 0.0
    %662 = vmatprep.subr.mxu0 0.0
    %663 = vmatpush1.msra.mxu0 0.0
    %664 = vmatprep.subr.mxu0 0.0
    %665 = vmatpush1.msra.mxu0 0.0
    %666 = vmatprep.subr.mxu0 0.0
    %667 = vmatpush1.msra.mxu0 0.0
    %668 = vmatprep.subr.mxu0 0.0
    %669 = vmatpush1.msra.mxu0 0.0
    %670 = vmatprep.subr.mxu0 0.0
    %671 = vmatpush1.msra.mxu0 0.0
    %672 = vmatprep.subr.mxu0 0.0
    %673 = vmatpush1.msra.mxu0 0.0
    %674 = vmatprep.subr.mxu0 0.0
    %675 = vmatpush1.msra.mxu0 %v71
    %676 = vmatprep.subr.mxu0 0.0
    %677 = vmatpush2.msra.mxu0 0.0
    %678 = vmatprep.subr.mxu0 0.0
    %679 = vmatpush2.msra.mxu0 0.0
    %680 = vmatprep.subr.mxu0 0.0
    %681 = vmatpush2.msra.mxu0 0.0
    %682 = vmatprep.subr.mxu0 0.0
    %683 = vmatpush2.msra.mxu0 0.0
    %684 = vmatprep.subr.mxu0 0.0
    %685 = vmatpush2.msra.mxu0 0.0
    %686 = vmatprep.subr.mxu0 0.0
    %687 = vmatpush2.msra.mxu0 0.0
    %688 = vmatprep.subr.mxu0 0.0
    %689 = vmatpush2.msra.mxu0 0.0
    %690 = vmatprep.subr.mxu0 0.0
    %691 = vmatpush2.msra.mxu0 0.0
    %692 = vmatprep.subr.mxu0 0.0
    %693 = vmatpush2.msra.mxu0 0.0
    %694 = vmatprep.subr.mxu0 0.0
    %695 = vmatpush2.msra.mxu0 0.0
    %696 = vmatprep.subr.mxu0 0.0
    %697 = vmatpush2.msra.mxu0 0.0
    %698 = vmatprep.subr.mxu0 0.0
    %699 = vmatpush2.msra.mxu0 0.0
    %700 = vmatprep.subr.mxu0 0.0
    %701 = vmatpush2.msra.mxu0 0.0
    %702 = vmatprep.subr.mxu0 0.0
    %703 = vmatpush2.msra.mxu0 0.0
    %704 = vmatprep.subr.mxu0 0.0
    %705 = vmatpush2.msra.mxu0 0.0
    %706 = vmatprep.subr.mxu0 0.0
    %707 = vmatpush2.msra.mxu0 0.0
    %708 = vmatprep.mubr.f32.mxu0 0.0
    %709 = vmatmul.mubr.f32.gmra.mxu0 %v642
    %v710 = vpop.f32.mrf.mxu0
    %v711 = vadd.f32 0.0, %v710
    %v712 = vpop.f32.mrf.mxu0
    %713 = vdwg.mxu0
    %714 = vst.msk [vmem:[#allocation8] sm:$0xff] %vm72, %v492
    %715 = vst.msk [vmem:[#allocation8 + $0x8] sm:$0xff] %vm72, %v565
    %716 = vst.msk [vmem:[#allocation8 + $0x10] sm:$0xff] %vm72, %v638
    %717 = vst.msk [vmem:[#allocation8 + $0x18] sm:$0xff] %vm72, %v711
    // Predicated region
    $region26: #{tpu_custom_call.1} parent=1 // pred_check
      _
    $region27: #{tpu_custom_call.1} parent=1 // pred_check_branch
      %719 = sbr.rel (0) target = $region29
    $region28: #{tpu_custom_call.1} parent=1 // pred_region
      %s721 = ssub.s32 512, 512
      %722 = vsyncadd [#allocation4], %s721
      %s723 = sshll.u32 [#allocation8], 4
      %s724 = int_to_ptr.vmem [resolvable:$true] %s723
      %729 = dma.vmem_to_hbm [thread:$0]  %s724, 512, %s3, [#allocation4], 128, 128, 8
    $region29: #{tpu_custom_call.1} parent=1 // pred_fallthru
      _
    // Predicated region
    $region30: #{tpu_custom_call.1} parent=1 // pred_check
      _
    $region31: #{tpu_custom_call.1} parent=1 // pred_check_branch
      %731 = sbr.rel (0) target = $region33
    $region32: #{tpu_custom_call.1} parent=1 // pred_region
      %732 = dma.done [#allocation4], 512
    $region33: #{tpu_custom_call.1} parent=1 // pred_fallthru
      _
    %733 = vsyncpa [#allocation3], 1
    %734 = vsyncpa [#allocation6], 1
    %735 = vsyncpa [#allocation4], 1

</llo_original>
